<compile_context>
chip_gen: v7x
topology: tpu7x:2x2x1
jax: 0.10.0
libtpu: 0.0.40
codegen_flags: <defaults>
</compile_context>

<pallas_src>
import functools

import jax
import jax.numpy as jnp
from jax.experimental import pallas as pl
from jax.experimental.pallas import tpu as pltpu

KH = KW = 3  # kernel_size = 3


def _conv_banded_kernel(x_ref, bw_ref, b_ref, o_ref, *, ho):
    """One image per grid step.

    x_ref : (H, W*Cin)            lane-dense input rows        (VMEM)
    bw_ref: (KH, W*Cin, Cout*Wo)  banded (Toeplitz) weights    (VMEM, resident)
    b_ref : (1, Cout*Wo)          bias repeated over ow        (VMEM, resident)
    o_ref : (Ho, Cout*Wo)         result, ordering (oh, co, ow)
    """
    # kh = 0 tap: rows 0..Ho-1 of the input, one MXU dot (K = W*Cin).
    acc = jnp.dot(x_ref[0:ho, :], bw_ref[0],
                  preferred_element_type=jnp.float32)
    # Remaining taps: shifted contiguous sublane windows, accumulate on VPU.
    for kh in range(1, KH):
        acc = acc + jnp.dot(x_ref[kh:kh + ho, :], bw_ref[kh],
                            preferred_element_type=jnp.float32)
    o_ref[...] = (acc + b_ref[...]).astype(o_ref.dtype)


@jax.jit
def conv_model_forward(x_nchw, weight, bias):
    """Forward pass of ConvModel.

    x_nchw : (N, Cin, H, W)    float32
    weight : (Cout, Cin, 3, 3) float32  (PyTorch layout)
    bias   : (Cout,)           float32
    returns: 1-D array of shape (N * Cout * Ho * Wo,)  (torch.flatten order)
    """
    n, c_in, h, w = x_nchw.shape
    c_out = weight.shape[0]
    ho, wo = h - KH + 1, w - KW + 1

    # ---- wrapper-side layout glue (all tiny, one XLA op each) --------------
    # Lane-dense input view: (N, H, W*Cin).
    x_rows = jnp.transpose(x_nchw, (0, 2, 3, 1)).reshape(n, h, w * c_in)

    # Banded (Toeplitz) weights:
    #   banded[kh, w*Cin + ci, co*Wo + ow] = weight[co, ci, kh, w - ow]
    #                                        if 0 <= w - ow < KW else 0.
    w_t = jnp.transpose(weight, (2, 3, 1, 0))                   # (KH, KW, Cin, Cout)
    kw_idx = jnp.arange(w)[:, None] - jnp.arange(wo)[None, :]   # (W, Wo)
    valid = (kw_idx >= 0) & (kw_idx < KW)
    gathered = w_t[:, jnp.clip(kw_idx, 0, KW - 1), :, :]        # (KH, W, Wo, Cin, Cout)
    banded = jnp.where(valid[None, :, :, None, None], gathered, 0.0)
    banded = jnp.transpose(banded, (0, 1, 3, 4, 2))             # (KH, W, Cin, Cout, Wo)
    banded = banded.reshape(KH, w * c_in, c_out * wo)

    # Bias broadcast row, matching the (co, ow) column ordering.
    b_row = jnp.repeat(bias, wo).reshape(1, c_out * wo)

    kernel = functools.partial(_conv_banded_kernel, ho=ho)

    flops = 2 * n * KH * ho * (w * c_in) * (c_out * wo)
    bytes_accessed = 4 * (x_rows.size + banded.size + b_row.size
                          + n * ho * c_out * wo)

    out = pl.pallas_call(
        kernel,
        out_shape=jax.ShapeDtypeStruct((n, ho, c_out * wo), x_nchw.dtype),
        grid=(n,),
        in_specs=[
            # per-image lane-dense rows
            pl.BlockSpec((None, h, w * c_in), lambda i: (i, 0, 0)),
            # banded weights: same block every step -> resident across grid
            pl.BlockSpec((KH, w * c_in, c_out * wo), lambda i: (0, 0, 0)),
            # bias row: resident
            pl.BlockSpec((1, c_out * wo), lambda i: (0, 0)),
        ],
        out_specs=pl.BlockSpec((None, ho, c_out * wo), lambda i: (i, 0, 0)),
        compiler_params=pltpu.CompilerParams(
            dimension_semantics=("parallel",)),   # images across TCs on v7x
        cost_estimate=pl.CostEstimate(
            flops=flops, transcendentals=0, bytes_accessed=bytes_accessed),
    )(x_rows, banded, b_row)

    # (n, oh, co, ow) -> (n, co, oh, ow) -> flat: matches torch.flatten of the
    # NCHW conv output.  22 KiB permute; kept in the wrapper (see header).
    return out.reshape(n, ho, c_out, wo).transpose(0, 2, 1, 3).reshape(-1)


if __name__ == "__main__":
    # Small shapes consistent with the module: batch=2, c_in=4, c_out=8, 16x16.
    N, C_IN, C_OUT, H, W = 2, 4, 8, 16, 16

    key = jax.random.PRNGKey(0)
    kx, kw, kb = jax.random.split(key, 3)

    x = jax.random.normal(kx, (N, C_IN, H, W), dtype=jnp.float32)
    fan_in = C_IN * KH * KW
    bound = 1.0 / float(fan_in) ** 0.5
    weight = jax.random.uniform(
        kw, (C_OUT, C_IN, KH, KW), dtype=jnp.float32, minval=-bound, maxval=bound
    )
    bias = jax.random.uniform(
        kb, (C_OUT,), dtype=jnp.float32, minval=-bound, maxval=bound
    )

    out = jax.block_until_ready(conv_model_forward(x, weight, bias))

    # Sanity check against XLA's conv (same semantics as nn.Conv2d + flatten).
    ref = jax.lax.conv_general_dilated(
        x, weight, window_strides=(1, 1), padding="VALID",
        dimension_numbers=("NCHW", "OIHW", "NCHW"),
    ) + bias.reshape(1, C_OUT, 1, 1)
    ref = ref.reshape(-1)

    assert out.shape == (N * C_OUT * (H - 2) * (W - 2),)
    assert jnp.allclose(out, ref, atol=1e-4, rtol=1e-4)

    print("KERNEL_OK")
</pallas_src>

<mosaic_0001>
module attributes {stable_mosaic.version = 11 : i64} {
  func.func @_conv_banded_kernel(%arg0: i32, %arg1: memref<1x16x64xf32, #tpu.memory_space<vmem>>, %arg2: memref<3x64x112xf32, #tpu.memory_space<vmem>>, %arg3: memref<1x112xf32, #tpu.memory_space<vmem>>, %arg4: memref<1x14x112xf32, #tpu.memory_space<vmem>>) attributes {dimension_semantics = [#tpu.dimension_semantics<parallel>], iteration_bounds = array<i64: 2>, scalar_prefetch = 0 : i64, scratch_operands = 0 : i64, tpu.core_type = #tpu.core_type<tc>, window_params = [{transform_indices = @transform_0, window_bounds = array<i64: 1, 16, 64>}, {pipeline_mode = #tpu.pipeline_mode<synchronous>, transform_indices = @transform_1, window_bounds = array<i64: 3, 64, 112>}, {pipeline_mode = #tpu.pipeline_mode<synchronous>, transform_indices = @transform_2, window_bounds = array<i64: 1, 112>}, {transform_indices = @transform_3, window_bounds = array<i64: 1, 14, 112>}]} {
    %c0 = arith.constant 0 : index
    %c0_0 = arith.constant 0 : index
    %c0_1 = arith.constant 0 : index
    %0 = vector.load %arg1[%c0, %c0_0, %c0_1] : memref<1x16x64xf32, #tpu.memory_space<vmem>>, vector<1x14x64xf32>
    %1 = vector.shape_cast %0 : vector<1x14x64xf32> to vector<14x64xf32>
    %c0_2 = arith.constant 0 : index
    %c0_3 = arith.constant 0 : index
    %c0_4 = arith.constant 0 : index
    %2 = vector.load %arg2[%c0_2, %c0_3, %c0_4] : memref<3x64x112xf32, #tpu.memory_space<vmem>>, vector<1x64x112xf32>
    %3 = vector.shape_cast %2 : vector<1x64x112xf32> to vector<64x112xf32>
    %cst = arith.constant dense<0.000000e+00> : vector<14x112xf32>
    %4 = tpu.matmul %1, %3, %cst {dimension_numbers = #tpu.dot_dimension_numbers<[1], [0], [0], [1], [0, 0, 1, 1], [], []>} : vector<14x64xf32>, vector<64x112xf32>, vector<14x112xf32> -> vector<14x112xf32>
    %c0_5 = arith.constant 0 : index
    %c1 = arith.constant 1 : index
    %c0_6 = arith.constant 0 : index
    %5 = vector.load %arg1[%c0_5, %c1, %c0_6] : memref<1x16x64xf32, #tpu.memory_space<vmem>>, vector<1x14x64xf32>
    %6 = vector.shape_cast %5 : vector<1x14x64xf32> to vector<14x64xf32>
    %c1_7 = arith.constant 1 : index
    %c0_8 = arith.constant 0 : index
    %c0_9 = arith.constant 0 : index
    %7 = vector.load %arg2[%c1_7, %c0_8, %c0_9] : memref<3x64x112xf32, #tpu.memory_space<vmem>>, vector<1x64x112xf32>
    %8 = vector.shape_cast %7 : vector<1x64x112xf32> to vector<64x112xf32>
    %cst_10 = arith.constant dense<0.000000e+00> : vector<14x112xf32>
    %9 = tpu.matmul %6, %8, %cst_10 {dimension_numbers = #tpu.dot_dimension_numbers<[1], [0], [0], [1], [0, 0, 1, 1], [], []>} : vector<14x64xf32>, vector<64x112xf32>, vector<14x112xf32> -> vector<14x112xf32>
    %10 = arith.addf %4, %9 : vector<14x112xf32>
    %c0_11 = arith.constant 0 : index
    %c2 = arith.constant 2 : index
    %c0_12 = arith.constant 0 : index
    %11 = vector.load %arg1[%c0_11, %c2, %c0_12] : memref<1x16x64xf32, #tpu.memory_space<vmem>>, vector<1x14x64xf32>
    %12 = vector.shape_cast %11 : vector<1x14x64xf32> to vector<14x64xf32>
    %c2_13 = arith.constant 2 : index
    %c0_14 = arith.constant 0 : index
    %c0_15 = arith.constant 0 : index
    %13 = vector.load %arg2[%c2_13, %c0_14, %c0_15] : memref<3x64x112xf32, #tpu.memory_space<vmem>>, vector<1x64x112xf32>
    %14 = vector.shape_cast %13 : vector<1x64x112xf32> to vector<64x112xf32>
    %cst_16 = arith.constant dense<0.000000e+00> : vector<14x112xf32>
    %15 = tpu.matmul %12, %14, %cst_16 {dimension_numbers = #tpu.dot_dimension_numbers<[1], [0], [0], [1], [0, 0, 1, 1], [], []>} : vector<14x64xf32>, vector<64x112xf32>, vector<14x112xf32> -> vector<14x112xf32>
    %16 = arith.addf %10, %15 : vector<14x112xf32>
    %c0_17 = arith.constant 0 : index
    %c0_18 = arith.constant 0 : index
    %17 = vector.load %arg3[%c0_17, %c0_18] : memref<1x112xf32, #tpu.memory_space<vmem>>, vector<1x112xf32>
    %18 = vector.broadcast %17 : vector<1x112xf32> to vector<14x112xf32>
    %19 = arith.addf %16, %18 : vector<14x112xf32>
    %c0_19 = arith.constant 0 : index
    %c0_20 = arith.constant 0 : index
    %c0_21 = arith.constant 0 : index
    %20 = vector.load %arg4[%c0_19, %c0_20, %c0_21] : memref<1x14x112xf32, #tpu.memory_space<vmem>>, vector<1x14x112xf32>
    %21 = vector.shape_cast %20 : vector<1x14x112xf32> to vector<14x112xf32>
    %22 = vector.shape_cast %19 : vector<14x112xf32> to vector<1x14x112xf32>
    tpu.vector_store %arg4[%c0_19, %c0_20, %c0_21], %22 {strides = array<i32>} : memref<1x14x112xf32, #tpu.memory_space<vmem>>, vector<1x14x112xf32>,
    return
  }
  func.func @transform_0(%arg0: i32) -> (i32, i32, i32) {
    %c0_i32 = arith.constant 0 : i32
    %c0_i32_0 = arith.constant 0 : i32
    %c0_i32_1 = arith.constant 0 : i32
    return %arg0, %c0_i32, %c0_i32_0 : i32, i32, i32
  }
  func.func @transform_1(%arg0: i32) -> (i32, i32, i32) {
    %c0_i32 = arith.constant 0 : i32
    %c0_i32_0 = arith.constant 0 : i32
    %c0_i32_1 = arith.constant 0 : i32
    %c0_i32_2 = arith.constant 0 : i32
    return %c0_i32, %c0_i32_0, %c0_i32_1 : i32, i32, i32
  }
  func.func @transform_2(%arg0: i32) -> (i32, i32) {
    %c0_i32 = arith.constant 0 : i32
    %c0_i32_0 = arith.constant 0 : i32
    %c0_i32_1 = arith.constant 0 : i32
    return %c0_i32, %c0_i32_0 : i32, i32
  }
  func.func @transform_3(%arg0: i32) -> (i32, i32, i32) {
    %c0_i32 = arith.constant 0 : i32
    %c0_i32_0 = arith.constant 0 : i32
    %c0_i32_1 = arith.constant 0 : i32
    return %arg0, %c0_i32, %c0_i32_0 : i32, i32, i32
  }
}

</mosaic_0001>

<llo_original>
// kernel: conv_model_forward.1
$region0: #{conv_model_forward.1}
  #allocation0 [shape = 'u32[]', space=smem, size = 0x4, offset = 0x4, fixed_abs, tag = 'smem constant byte address 0x4 - core index']
  #allocation1 [shape = 'u32[144,128]{1,0:T(1,128)}', space=vmem, size = 0x12000, scoped, tag = 'internal scratch']
  %s0 = inlined_call_operand.vmem [shape: f32[2,16,64], index: 0, kind: input, shape index: {}]
  %s1 = inlined_call_operand.vmem [shape: f32[3,64,112], index: 1, kind: input, shape index: {}]
  %s2 = inlined_call_operand.vmem [shape: f32[1,112], index: 2, kind: input, shape index: {}]
  %s3 = inlined_call_operand.vmem [shape: f32[2,14,112], index: 3, kind: output, shape index: {}]
  %s4 = sld [smem:[#allocation0]]
  $region45: #{conv_model_forward.1} parent=0
    _
  %s6 = ssub.s32 1, %s4
  %s7 = scalar_select 0, %s6, %s4
  loop: start=0, step=1, limit=4
  $region2: #{conv_model_forward.1} parent=0 // loop_pre_header
    _
  $region3: #{conv_model_forward.1} parent=0 // loop_header
    %s9 = sphi 0, %s13
    %p10 = scmp.ge.s32.totalorder %s9, 4
    %s19 = sphi 0, %s21
    %s22 = sphi 0, %s19
    %s23 = sphi 0, %s22
    %s39 = sphi 0, %s23
    %s43 = sphi 0, %s43
    %s45 = sphi 0, %s43
    %s46 = sphi 0, %s45
    %s60 = sphi 0, %s46
    %s64 = sphi 0, %s64
    %s66 = sphi 0, %s64
    %s67 = sphi 0, %s66
    %s81 = sphi 0, %s67
    %s87 = sphi 0, %s89
    %s90 = sphi 0, %s87
    %s91 = sphi 0, %s90
    %s107 = sphi 0, %s91
  $region4: #{conv_model_forward.1} parent=0 // loop_header_branch
    %12 = sbr.rel (%p10) target = $region8
  $region5: #{conv_model_forward.1} parent=0 // loop_body
    %s14 = ssub.s32 %s9, 1
    %s15 = ssub.s32 %s9, 2
    %s16 = sadd.s32 %s9, 1
    %s17 = ssub.s32 %s9, %s16
    %p18 = scmp.eq.s32.totalorder %s17, 0
    %s20 = sadd.s32 %s19, 1
    %s21 = scalar_select %p18, %s19, %s20
    %p24 = pneg %p18
    %p25 = scmp.eq.s32.totalorder %s9, 1
    %p26 = por %p24, %p25
    %p27 = scmp.ne.s32.totalorder %s19, %s22
    %p28 = scmp.eq.s32.totalorder %s9, 0
    %p29 = por %p27, %p28
    %p30 = scmp.ne.s32.totalorder %s19, %s22
    %p31 = scmp.eq.s32.totalorder %s14, 1
    %p32 = por %p30, %p31
    %p33 = scmp.ne.s32.totalorder %s22, %s23
    %p34 = scmp.eq.s32.totalorder %s14, 0
    %p35 = por %p33, %p34
    %p36 = scmp.ne.s32.totalorder %s22, %s23
    %p37 = scmp.eq.s32.totalorder %s15, 1
    %p38 = por %p36, %p37
    %p40 = scmp.ne.s32.totalorder %s23, %s39
    %p41 = scmp.eq.s32.totalorder %s15, 0
    %p42 = por %p40, %p41
    %s44 = sadd.s32 %s43, 1
    %p47 = scmp.eq.s32.totalorder %s9, 1
    %p48 = scmp.ne.s32.totalorder %s43, %s45
    %p49 = scmp.eq.s32.totalorder %s9, 0
    %p50 = por %p48, %p49
    %p51 = scmp.ne.s32.totalorder %s43, %s45
    %p52 = scmp.eq.s32.totalorder %s14, 1
    %p53 = por %p51, %p52
    %p54 = scmp.ne.s32.totalorder %s45, %s46
    %p55 = scmp.eq.s32.totalorder %s14, 0
    %p56 = por %p54, %p55
    %p57 = scmp.ne.s32.totalorder %s45, %s46
    %p58 = scmp.eq.s32.totalorder %s15, 1
    %p59 = por %p57, %p58
    %p61 = scmp.ne.s32.totalorder %s46, %s60
    %p62 = scmp.eq.s32.totalorder %s15, 0
    %p63 = por %p61, %p62
    %s65 = sadd.s32 %s64, 1
    %p68 = scmp.eq.s32.totalorder %s9, 1
    %p69 = scmp.ne.s32.totalorder %s64, %s66
    %p70 = scmp.eq.s32.totalorder %s9, 0
    %p71 = por %p69, %p70
    %p72 = scmp.ne.s32.totalorder %s64, %s66
    %p73 = scmp.eq.s32.totalorder %s14, 1
    %p74 = por %p72, %p73
    %p75 = scmp.ne.s32.totalorder %s66, %s67
    %p76 = scmp.eq.s32.totalorder %s14, 0
    %p77 = por %p75, %p76
    %p78 = scmp.ne.s32.totalorder %s66, %s67
    %p79 = scmp.eq.s32.totalorder %s15, 1
    %p80 = por %p78, %p79
    %p82 = scmp.ne.s32.totalorder %s67, %s81
    %p83 = scmp.eq.s32.totalorder %s15, 0
    %p84 = por %p82, %p83
    %s85 = ssub.s32 %s9, %s16
    %p86 = scmp.eq.s32.totalorder %s85, 0
    %s88 = sadd.s32 %s87, 1
    %s89 = scalar_select %p86, %s87, %s88
    %p92 = pneg %p86
    %p93 = scmp.eq.s32.totalorder %s9, 1
    %p94 = por %p92, %p93
    %p95 = scmp.ne.s32.totalorder %s87, %s90
    %p96 = scmp.eq.s32.totalorder %s9, 0
    %p97 = por %p95, %p96
    %p98 = scmp.ne.s32.totalorder %s87, %s90
    %p99 = scmp.eq.s32.totalorder %s14, 1
    %p100 = por %p98, %p99
    %p101 = scmp.ne.s32.totalorder %s90, %s91
    %p102 = scmp.eq.s32.totalorder %s14, 0
    %p103 = por %p101, %p102
    %p104 = scmp.ne.s32.totalorder %s90, %s91
    %p105 = scmp.eq.s32.totalorder %s15, 1
    %p106 = por %p104, %p105
    %p108 = scmp.ne.s32.totalorder %s91, %s107
    %p109 = scmp.eq.s32.totalorder %s15, 0
    %p110 = por %p108, %p109
    %p111 = scmp.le.s32.totalorder 1, %s9
    %p112 = scmp.lt.s32.totalorder %s9, 3
    %p113 = pnand %p111, %p112
    %p114 = pneg %p113
    // Predicated region
    $region9: #{conv_model_forward.1} parent=5 // pred_check
      _
    $region10: #{conv_model_forward.1} parent=5 // pred_check_branch
      %116 = sbr.rel (%p113) target = $region12
    $region11: #{conv_model_forward.1} parent=5 // pred_region
      %s117 = ssub.s32 %s9, 1
      // Predicated region
      $region13: #{conv_model_forward.1} parent=11 // pred_check
        %p118 = pneg %p56
      $region14: #{conv_model_forward.1} parent=11 // pred_check_branch
        %120 = sbr.rel (%p118) target = $region16
      $region15: #{conv_model_forward.1} parent=11 // pred_region
        _
      $region16: #{conv_model_forward.1} parent=11 // pred_fallthru
        _
      // Predicated region
      $region17: #{conv_model_forward.1} parent=11 // pred_check
        %p121 = pneg %p77
      $region18: #{conv_model_forward.1} parent=11 // pred_check_branch
        %123 = sbr.rel (%p121) target = $region20
      $region19: #{conv_model_forward.1} parent=11 // pred_region
        _
      $region20: #{conv_model_forward.1} parent=11 // pred_fallthru
        _
    $region12: #{conv_model_forward.1} parent=5 // pred_fallthru
      _
    %p124 = scmp.lt.s32.totalorder %s9, 2
    // Predicated region
    $region21: #{conv_model_forward.1} parent=5 // pred_check
      %p125 = pneg %p124
    $region22: #{conv_model_forward.1} parent=5 // pred_check_branch
      %127 = sbr.rel (%p125) target = $region24
    $region23: #{conv_model_forward.1} parent=5 // pred_region
      // Predicated region
      $region25: #{conv_model_forward.1} parent=23 // pred_check
        %p128 = pneg %p29
      $region26: #{conv_model_forward.1} parent=23 // pred_check_branch
        %130 = sbr.rel (%p128) target = $region28
      $region27: #{conv_model_forward.1} parent=23 // pred_region
        %p131 = scmp.lt.s32.totalorder %s9, 1
        %s132 = scalar_select %p131, %s9, 1
        %s133 = smul.addr %s132, 2
        %s134 = smul.addr %s133, 8
        %s135 = scalar_lea.vmem %s0, %s134
      $region28: #{conv_model_forward.1} parent=23 // pred_fallthru
        _
    $region24: #{conv_model_forward.1} parent=5 // pred_fallthru
      _
    %p136 = scmp.le.s32.totalorder 1, %s9
    %p137 = scmp.lt.s32.totalorder %s9, 3
    %p138 = pnand %p136, %p137
    %p139 = pneg %p138
    // Predicated region
    $region29: #{conv_model_forward.1} parent=5 // pred_check
      _
    $region30: #{conv_model_forward.1} parent=5 // pred_check_branch
      %141 = sbr.rel (%p138) target = $region32
    $region31: #{conv_model_forward.1} parent=5 // pred_region
      %s142 = ssub.s32 %s9, 1
      %p143 = scmp.lt.s32.totalorder %s14, 1
      %s144 = scalar_select %p143, %s14, 1
      %s145 = smul.addr %s144, 2
      %s146 = smul.addr %s145, 8
      %s147 = scalar_lea.vmem %s0, %s146
      %p148 = pneg %p35
      %p149 = pneg %p32
      %p150 = pneg %p56
      %p151 = pneg %p53
      %p152 = pneg %p77
      %p153 = pneg %p74
      %p154 = pneg %p103
      %p155 = pneg %p100
      %p156 = scmp.lt.s32.totalorder %s14, 1
      %s157 = scalar_select %p156, %s14, 1
      %s158 = smul.addr %s157, 2
      %s159 = smul.addr %s158, 8
      %s160 = scalar_lea.vmem %s3, %s159
      %p161 = scmp.lt.s32.totalorder %s14, 1
      %s162 = scalar_select %p161, %s14, 1
      %s163 = smul.addr %s162, 2
      %s164 = smul.addr %s163, 8
      %s165 = scalar_lea.vmem %s0, %s164
      %p166 = scmp.lt.s32.totalorder %s14, 1
      %s167 = scalar_select %p166, %s14, 1
      %s168 = smul.addr %s167, 2
      %s169 = smul.addr %s168, 8
      %s170 = scalar_lea.vmem %s3, %s169
      %v171 = vld [vmem:[%s165] sm:$0xff]
      %v172 = vld [vmem:[%s165 + $0x8] sm:$0x3f]
      %v173 = vld [vmem:[%s1] sm:$0xff]
      %v174 = vld [vmem:[%s1 + $0x8] sm:$0xff]
      %v175 = vld [vmem:[%s1 + $0x10] sm:$0xff]
      %v176 = vld [vmem:[%s1 + $0x18] sm:$0xff]
      %v177 = vld [vmem:[%s1 + $0x20] sm:$0xff]
      %v178 = vld [vmem:[%s1 + $0x28] sm:$0xff]
      %v179 = vld [vmem:[%s1 + $0x30] sm:$0xff]
      %v180 = vld [vmem:[%s1 + $0x38] sm:$0xff]
      %v181 = vld [vmem:[%s165 + $0x1] sm:$0xff]
      %v182 = vld [vmem:[%s165 + $0x9] sm:$0x3f]
      %s183 = scalar_lea.vmem %s1, 64
      %v184 = vld [vmem:[%s183] sm:$0xff]
      %v185 = vld [vmem:[%s183 + $0x8] sm:$0xff]
      %v186 = vld [vmem:[%s183 + $0x10] sm:$0xff]
      %v187 = vld [vmem:[%s183 + $0x18] sm:$0xff]
      %v188 = vld [vmem:[%s183 + $0x20] sm:$0xff]
      %v189 = vld [vmem:[%s183 + $0x28] sm:$0xff]
      %v190 = vld [vmem:[%s183 + $0x30] sm:$0xff]
      %v191 = vld [vmem:[%s183 + $0x38] sm:$0xff]
      %vm192 = vcmask 523264
      %v194 = vsel %vm192, %v181, 0
      %v197 = vsel %vm192, %v182, 0
      %199 = vmatprep.subr.mxu0 0.0
      %200 = vmatpush1.msra.mxu0 %v184
      %201 = vmatprep.subr.mxu0 0.0
      %202 = vmatpush1.msra.mxu0 %v185
      %203 = vmatprep.subr.mxu0 0.0
      %204 = vmatpush1.msra.mxu0 %v186
      %205 = vmatprep.subr.mxu0 0.0
      %206 = vmatpush1.msra.mxu0 %v187
      %207 = vmatprep.subr.mxu0 0.0
      %208 = vmatpush1.msra.mxu0 %v188
      %209 = vmatprep.subr.mxu0 0.0
      %210 = vmatpush1.msra.mxu0 %v189
      %211 = vmatprep.subr.mxu0 0.0
      %212 = vmatpush1.msra.mxu0 %v190
      %213 = vmatprep.subr.mxu0 0.0
      %214 = vmatpush1.msra.mxu0 %v191
      %215 = vmatprep.subr.mxu0 0.0
      %216 = vmatpush1.msra.mxu0 0.0
      %217 = vmatprep.subr.mxu0 0.0
      %218 = vmatpush1.msra.mxu0 0.0
      %219 = vmatprep.subr.mxu0 0.0
      %220 = vmatpush1.msra.mxu0 0.0
      %221 = vmatprep.subr.mxu0 0.0
      %222 = vmatpush1.msra.mxu0 0.0
      %223 = vmatprep.subr.mxu0 0.0
      %224 = vmatpush1.msra.mxu0 0.0
      %225 = vmatprep.subr.mxu0 0.0
      %226 = vmatpush1.msra.mxu0 0.0
      %227 = vmatprep.subr.mxu0 0.0
      %228 = vmatpush1.msra.mxu0 0.0
      %229 = vmatprep.subr.mxu0 0.0
      %230 = vmatpush1.msra.mxu0 0.0
      %231 = vmatprep.subr.mxu0 0.0
      %232 = vmatpush1.msra.mxu0 0.0
      %233 = vmatprep.subr.mxu0 0.0
      %234 = vmatpush1.msra.mxu0 0.0
      %235 = vmatprep.subr.mxu0 0.0
      %236 = vmatpush1.msra.mxu0 0.0
      %237 = vmatprep.subr.mxu0 0.0
      %238 = vmatpush1.msra.mxu0 0.0
      %239 = vmatprep.subr.mxu0 0.0
      %240 = vmatpush1.msra.mxu0 0.0
      %241 = vmatprep.subr.mxu0 0.0
      %242 = vmatpush1.msra.mxu0 0.0
      %243 = vmatprep.subr.mxu0 0.0
      %244 = vmatpush1.msra.mxu0 0.0
      %245 = vmatprep.subr.mxu0 0.0
      %246 = vmatpush1.msra.mxu0 0.0
      %247 = vmatprep.subr.mxu0 0.0
      %248 = vmatpush1.msra.mxu0 0.0
      %249 = vmatprep.subr.mxu0 0.0
      %250 = vmatpush1.msra.mxu0 0.0
      %251 = vmatprep.subr.mxu0 0.0
      %252 = vmatpush1.msra.mxu0 0.0
      %253 = vmatprep.subr.mxu0 0.0
      %254 = vmatpush1.msra.mxu0 0.0
      %255 = vmatprep.subr.mxu0 0.0
      %256 = vmatpush1.msra.mxu0 0.0
      %257 = vmatprep.subr.mxu0 0.0
      %258 = vmatpush1.msra.mxu0 0.0
      %259 = vmatprep.subr.mxu0 0.0
      %260 = vmatpush1.msra.mxu0 0.0
      %261 = vmatprep.subr.mxu0 0.0
      %262 = vmatpush1.msra.mxu0 0.0
      %263 = vmatprep.mubr.f32.mxu0 0.0
      %264 = vmatmul.mubr.f32.gmra.mrb[0].mxu0 %v194
      %v265 = vpop.f32.mrb[0].mxu0
      %v266 = vadd.f32 0.0, %v265
      %v267 = vpop.f32.mrb[0].mxu0
      %268 = vmatprep.mubr.f32.mxu0 0.0
      %269 = vmatmul.mubr.f32.gmra.mrb[0].mxu0 %v197
      %v270 = vpop.f32.mrb[0].mxu0
      %v271 = vadd.f32 0.0, %v270
      %v272 = vpop.f32.mrb[0].mxu0
      %273 = vdwg.mxu0
      %v275 = vsel %vm192, %v171, 0
      %v278 = vsel %vm192, %v172, 0
      %280 = vmatprep.subr.mxu0 0.0
      %281 = vmatpush1.msra.mxu0 %v173
      %282 = vmatprep.subr.mxu0 0.0
      %283 = vmatpush1.msra.mxu0 %v174
      %284 = vmatprep.subr.mxu0 0.0
      %285 = vmatpush1.msra.mxu0 %v175
      %286 = vmatprep.subr.mxu0 0.0
      %287 = vmatpush1.msra.mxu0 %v176
      %288 = vmatprep.subr.mxu0 0.0
      %289 = vmatpush1.msra.mxu0 %v177
      %290 = vmatprep.subr.mxu0 0.0
      %291 = vmatpush1.msra.mxu0 %v178
      %292 = vmatprep.subr.mxu0 0.0
      %293 = vmatpush1.msra.mxu0 %v179
      %294 = vmatprep.subr.mxu0 0.0
      %295 = vmatpush1.msra.mxu0 %v180
      %296 = vmatprep.subr.mxu0 0.0
      %297 = vmatpush1.msra.mxu0 0.0
      %298 = vmatprep.subr.mxu0 0.0
      %299 = vmatpush1.msra.mxu0 0.0
      %300 = vmatprep.subr.mxu0 0.0
      %301 = vmatpush1.msra.mxu0 0.0
      %302 = vmatprep.subr.mxu0 0.0
      %303 = vmatpush1.msra.mxu0 0.0
      %304 = vmatprep.subr.mxu0 0.0
      %305 = vmatpush1.msra.mxu0 0.0
      %306 = vmatprep.subr.mxu0 0.0
      %307 = vmatpush1.msra.mxu0 0.0
      %308 = vmatprep.subr.mxu0 0.0
      %309 = vmatpush1.msra.mxu0 0.0
      %310 = vmatprep.subr.mxu0 0.0
      %311 = vmatpush1.msra.mxu0 0.0
      %312 = vmatprep.subr.mxu0 0.0
      %313 = vmatpush1.msra.mxu0 0.0
      %314 = vmatprep.subr.mxu0 0.0
      %315 = vmatpush1.msra.mxu0 0.0
      %316 = vmatprep.subr.mxu0 0.0
      %317 = vmatpush1.msra.mxu0 0.0
      %318 = vmatprep.subr.mxu0 0.0
      %319 = vmatpush1.msra.mxu0 0.0
      %320 = vmatprep.subr.mxu0 0.0
      %321 = vmatpush1.msra.mxu0 0.0
      %322 = vmatprep.subr.mxu0 0.0
      %323 = vmatpush1.msra.mxu0 0.0
      %324 = vmatprep.subr.mxu0 0.0
      %325 = vmatpush1.msra.mxu0 0.0
      %326 = vmatprep.subr.mxu0 0.0
      %327 = vmatpush1.msra.mxu0 0.0
      %328 = vmatprep.subr.mxu0 0.0
      %329 = vmatpush1.msra.mxu0 0.0
      %330 = vmatprep.subr.mxu0 0.0
      %331 = vmatpush1.msra.mxu0 0.0
      %332 = vmatprep.subr.mxu0 0.0
      %333 = vmatpush1.msra.mxu0 0.0
      %334 = vmatprep.subr.mxu0 0.0
      %335 = vmatpush1.msra.mxu0 0.0
      %336 = vmatprep.subr.mxu0 0.0
      %337 = vmatpush1.msra.mxu0 0.0
      %338 = vmatprep.subr.mxu0 0.0
      %339 = vmatpush1.msra.mxu0 0.0
      %340 = vmatprep.subr.mxu0 0.0
      %341 = vmatpush1.msra.mxu0 0.0
      %342 = vmatprep.subr.mxu0 0.0
      %343 = vmatpush1.msra.mxu0 0.0
      %344 = vmatprep.mubr.f32.mxu0 0.0
      %345 = vmatmul.mubr.f32.gmra.mrb[0].mxu0 %v275
      %v346 = vpop.f32.mrb[0].mxu0
      %v347 = vadd.f32 %v266, %v346
      %v348 = vpop.f32.mrb[0].mxu0
      %349 = vmatprep.mubr.f32.mxu0 0.0
      %350 = vmatmul.mubr.f32.gmra.mrb[0].mxu0 %v278
      %v351 = vpop.f32.mrb[0].mxu0
      %v352 = vadd.f32 %v271, %v351
      %v353 = vpop.f32.mrb[0].mxu0
      %354 = vdwg.mxu0
      %v355 = vld [vmem:[%s165 + $0x2] sm:$0xff]
      %v356 = vld [vmem:[%s165 + $0xa] sm:$0x3f]
      %s357 = scalar_lea.vmem %s1, 128
      %v358 = vld [vmem:[%s357] sm:$0xff]
      %v359 = vld [vmem:[%s357 + $0x8] sm:$0xff]
      %v360 = vld [vmem:[%s357 + $0x10] sm:$0xff]
      %v361 = vld [vmem:[%s357 + $0x18] sm:$0xff]
      %v362 = vld [vmem:[%s357 + $0x20] sm:$0xff]
      %v363 = vld [vmem:[%s357 + $0x28] sm:$0xff]
      %v364 = vld [vmem:[%s357 + $0x30] sm:$0xff]
      %v365 = vld [vmem:[%s357 + $0x38] sm:$0xff]
      %v367 = vsel %vm192, %v355, 0
      %v370 = vsel %vm192, %v356, 0
      %372 = vmatprep.subr.mxu0 0.0
      %373 = vmatpush1.msra.mxu0 %v358
      %374 = vmatprep.subr.mxu0 0.0
      %375 = vmatpush1.msra.mxu0 %v359
      %376 = vmatprep.subr.mxu0 0.0
      %377 = vmatpush1.msra.mxu0 %v360
      %378 = vmatprep.subr.mxu0 0.0
      %379 = vmatpush1.msra.mxu0 %v361
      %380 = vmatprep.subr.mxu0 0.0
      %381 = vmatpush1.msra.mxu0 %v362
      %382 = vmatprep.subr.mxu0 0.0
      %383 = vmatpush1.msra.mxu0 %v363
      %384 = vmatprep.subr.mxu0 0.0
      %385 = vmatpush1.msra.mxu0 %v364
      %386 = vmatprep.subr.mxu0 0.0
      %387 = vmatpush1.msra.mxu0 %v365
      %388 = vmatprep.subr.mxu0 0.0
      %389 = vmatpush1.msra.mxu0 0.0
      %390 = vmatprep.subr.mxu0 0.0
      %391 = vmatpush1.msra.mxu0 0.0
      %392 = vmatprep.subr.mxu0 0.0
      %393 = vmatpush1.msra.mxu0 0.0
      %394 = vmatprep.subr.mxu0 0.0
      %395 = vmatpush1.msra.mxu0 0.0
      %396 = vmatprep.subr.mxu0 0.0
      %397 = vmatpush1.msra.mxu0 0.0
      %398 = vmatprep.subr.mxu0 0.0
      %399 = vmatpush1.msra.mxu0 0.0
      %400 = vmatprep.subr.mxu0 0.0
      %401 = vmatpush1.msra.mxu0 0.0
      %402 = vmatprep.subr.mxu0 0.0
      %403 = vmatpush1.msra.mxu0 0.0
      %404 = vmatprep.subr.mxu0 0.0
      %405 = vmatpush1.msra.mxu0 0.0
      %406 = vmatprep.subr.mxu0 0.0
      %407 = vmatpush1.msra.mxu0 0.0
      %408 = vmatprep.subr.mxu0 0.0
      %409 = vmatpush1.msra.mxu0 0.0
      %410 = vmatprep.subr.mxu0 0.0
      %411 = vmatpush1.msra.mxu0 0.0
      %412 = vmatprep.subr.mxu0 0.0
      %413 = vmatpush1.msra.mxu0 0.0
      %414 = vmatprep.subr.mxu0 0.0
      %415 = vmatpush1.msra.mxu0 0.0
      %416 = vmatprep.subr.mxu0 0.0
      %417 = vmatpush1.msra.mxu0 0.0
      %418 = vmatprep.subr.mxu0 0.0
      %419 = vmatpush1.msra.mxu0 0.0
      %420 = vmatprep.subr.mxu0 0.0
      %421 = vmatpush1.msra.mxu0 0.0
      %422 = vmatprep.subr.mxu0 0.0
      %423 = vmatpush1.msra.mxu0 0.0
      %424 = vmatprep.subr.mxu0 0.0
      %425 = vmatpush1.msra.mxu0 0.0
      %426 = vmatprep.subr.mxu0 0.0
      %427 = vmatpush1.msra.mxu0 0.0
      %428 = vmatprep.subr.mxu0 0.0
      %429 = vmatpush1.msra.mxu0 0.0
      %430 = vmatprep.subr.mxu0 0.0
      %431 = vmatpush1.msra.mxu0 0.0
      %432 = vmatprep.subr.mxu0 0.0
      %433 = vmatpush1.msra.mxu0 0.0
      %434 = vmatprep.subr.mxu0 0.0
      %435 = vmatpush1.msra.mxu0 0.0
      %436 = vmatprep.mubr.f32.mxu0 0.0
      %437 = vmatmul.mubr.f32.gmra.mrb[0].mxu0 %v367
      %v438 = vpop.f32.mrb[0].mxu0
      %v439 = vadd.f32 0.0, %v438
      %v440 = vpop.f32.mrb[0].mxu0
      %441 = vmatprep.mubr.f32.mxu0 0.0
      %442 = vmatmul.mubr.f32.gmra.mrb[0].mxu0 %v370
      %v443 = vpop.f32.mrb[0].mxu0
      %v444 = vadd.f32 0.0, %v443
      %v445 = vpop.f32.mrb[0].mxu0
      %446 = vdwg.mxu0
      %v447 = vadd.f32 %v347, %v439
      %v448 = vadd.f32 %v352, %v444
      %v449 = vld [vmem:[%s2] sm:$0x1]
      %v451 = vlaneseq
      %v452 = vshrl.u32 %v451, 7
      %v453 = vsub.s32 0, %v452
      %v454 = vrot.slane %v449, %v453
      %v456 = vadd.f32 %v447, %v454
      %v457 = vadd.f32 %v448, %v454
      %vm458 = vcmask 916480
      %459 = vst.msk [vmem:[%s170] sm:$0xff] %vm458, %v456
      %vm460 = vcmask 914432
      %461 = vst.msk [vmem:[%s170 + $0x8] sm:$0x3f] %vm460, %v457
      %p462 = scmp.lt.s32.totalorder %s14, 1
      %s463 = scalar_select %p462, %s14, 1
      %s464 = smul.addr %s463, 2
      %s465 = smul.addr %s464, 8
      %s466 = scalar_lea.vmem %s3, %s465
      // Predicated region
      $region33: #{conv_model_forward.1} parent=31 // pred_check
        %p467 = pneg %p100
      $region34: #{conv_model_forward.1} parent=31 // pred_check_branch
        %469 = sbr.rel (%p467) target = $region36
      $region35: #{conv_model_forward.1} parent=31 // pred_region
        _
      $region36: #{conv_model_forward.1} parent=31 // pred_fallthru
        _
    $region32: #{conv_model_forward.1} parent=5 // pred_fallthru
      _
    %p470 = scmp.le.s32.totalorder 2, %s9
    // Predicated region
    $region37: #{conv_model_forward.1} parent=5 // pred_check
      %p471 = pneg %p470
    $region38: #{conv_model_forward.1} parent=5 // pred_check_branch
      %473 = sbr.rel (%p471) target = $region40
    $region39: #{conv_model_forward.1} parent=5 // pred_region
      %s474 = ssub.s32 %s9, 2
      // Predicated region
      $region41: #{conv_model_forward.1} parent=39 // pred_check
        %p475 = pneg %p106
      $region42: #{conv_model_forward.1} parent=39 // pred_check_branch
        %477 = sbr.rel (%p475) target = $region44
      $region43: #{conv_model_forward.1} parent=39 // pred_region
        %p478 = scmp.lt.s32.totalorder %s15, 1
        %s479 = scalar_select %p478, %s15, 1
        %s480 = smul.addr %s479, 2
        %s481 = smul.addr %s480, 8
        %s482 = scalar_lea.vmem %s3, %s481
      $region44: #{conv_model_forward.1} parent=39 // pred_fallthru
        _
    $region40: #{conv_model_forward.1} parent=5 // pred_fallthru
      _
  $region6: #{conv_model_forward.1} parent=0 // loop_footer
    %s13 = sadd.s32 1, %s9
  $region7: #{conv_model_forward.1} parent=0 // loop_footer_branch
    %8 = sbr.rel target = $region3
  $region8: #{conv_model_forward.1} parent=0 // loop_exit
    _

</llo_original>
